<compile_context>
chip_gen: v6e
topology: v6e:2x2x1
jax: 0.10.0
libtpu: 0.0.40
codegen_flags: <defaults>
</compile_context>

<pallas_src>
import functools

import jax
import jax.numpy as jnp
import numpy as np
from jax import lax
from jax.experimental import pallas as pl
from jax.experimental.pallas import tpu as pltpu


def _round_up(x, m):
    return ((x + m - 1) // m) * m


# -----------------------------------------------------------------------------
# Fused decoder kernel: stacked dense chain (U & V together) + sigmoid(U @ V^T)
# -----------------------------------------------------------------------------
def ddne_dec_kernel(*refs, dims):
    """refs = (u_ref, v_ref, packed_w_ref_0..L-1, o_ref, x_scratch).

    dims = dec_dims tuple, e.g. (256, 64, 32). Each packed weight ref holds
      rows [0:k]   : fused weight (layer 0: [wU | wV]; later: blockdiag(wU, wV))
      rows [k:k+8] : bias row [bU | bV] padded to one sublane tile
    """
    num_layers = len(dims) - 1
    u_ref, v_ref = refs[0], refs[1]
    w_refs = refs[2:2 + num_layers]
    o_ref = refs[2 + num_layers]
    x_ref = refs[3 + num_layers]          # VMEM scratch [tu + tv, emb]

    tu = u_ref.shape[0]

    # Stack the U-tile on top of the V-tile (tu is a multiple of 8, so the boundary
    # stays sublane-aligned); one lane-dense activation slab => one MXU matmul/layer.
    x_ref[:tu, :] = u_ref[...]
    x_ref[tu:, :] = v_ref[...]
    x = x_ref[...]

    for l in range(num_layers):
        k = dims[l] if l == 0 else 2 * dims[l]
        w = w_refs[l][:k, :].astype(jnp.bfloat16)      # fused weight (bf16 MXU operands)
        b = w_refs[l][k:k + 1, :]                      # f32 bias row [1, 2*out_f]
        x = jnp.dot(x.astype(jnp.bfloat16), w,
                    preferred_element_type=jnp.float32) + b
        if l < num_layers - 1:
            x = jnp.maximum(x, 0.0)
            # TODO(synk): training-mode dropout (pltpu.prng_seed + stateful_bernoulli
            #             masking) not implemented; nn.Dropout is eval-mode identity.

    d = dims[-1]
    u_fin = x[:tu, :d].astype(jnp.bfloat16)            # U rows live in the left block
    v_fin = x[tu:, d:].astype(jnp.bfloat16)            # V rows live in the right block
    # sigmoid(u @ v^T): contract the LAST dims of both operands so V feeds the MXU
    # un-transposed (no explicit XLU transpose).
    s = lax.dot_general(u_fin, v_fin,
                        dimension_numbers=(((1,), (1,)), ((), ())),
                        preferred_element_type=jnp.float32)
    o_ref[...] = jax.nn.sigmoid(s).astype(o_ref.dtype)


# -----------------------------------------------------------------------------
# Host-side packing / advisory cost / VMEM budget
# -----------------------------------------------------------------------------
def _pack_layer(pU, pV, first):
    """Pack one decoder layer's U/V Linear params into a single f32 array."""
    wU, bU = pU["wt"], pU["b"]
    wV, bV = pV["wt"], pV["b"]
    in_f, out_f = wU.shape
    if first:                                           # shared input -> concat along N
        w = jnp.concatenate([wU, wV], axis=1)           # [in_f, 2*out_f]
    else:                                               # separate chains -> block diag
        w = jnp.zeros((2 * in_f, 2 * out_f), jnp.float32)
        w = w.at[:in_f, :out_f].set(wU).at[in_f:, out_f:].set(wV)
    b = jnp.concatenate([bU, bV], axis=1)               # [1, 2*out_f]
    b = jnp.zeros((8, 2 * out_f), jnp.float32).at[0:1, :].set(b)
    return jnp.concatenate([w, b], axis=0)              # [k + 8, 2*out_f]


def _cost_estimate(u_pad, v_pad, tu, tv, dec_dims):
    steps = (u_pad // tu) * (v_pad // tv)
    m = tu + tv
    flops, weight_bytes = 0, 0
    for l in range(len(dec_dims) - 1):
        k = dec_dims[l] if l == 0 else 2 * dec_dims[l]
        flops += 2 * m * k * 2 * dec_dims[l + 1] * steps      # fused stacked dense
        weight_bytes += 4 * (k + 8) * 2 * dec_dims[l + 1]
    flops += 2 * u_pad * v_pad * dec_dims[-1]                 # bilinear
    bytes_accessed = (4 * (tu + tv) * dec_dims[0] * steps     # streamed u/v tiles
                      + weight_bytes + 4 * u_pad * v_pad)     # weights + output
    return pl.CostEstimate(flops=flops, transcendentals=u_pad * v_pad,
                           bytes_accessed=bytes_accessed)


def _vmem_limit_bytes(tu, tv, emb, dec_dims, packed):
    f32 = 4
    live = (2 * (tu + tv) * emb * f32                                  # dbl-buffered u/v tiles
            + 2 * tu * tv * f32                                        # dbl-buffered out tile
            + 2 * sum(int(np.prod(p.shape)) for p in packed) * f32     # packed weights
            + 4 * (tu + tv) * max(emb, 2 * max(dec_dims)) * f32)       # stacked activations
    return int(min(max(2 * live, 16 * 2 ** 20), 48 * 2 ** 20))


# -----------------------------------------------------------------------------
# Wrapper
# -----------------------------------------------------------------------------
def ddne_dec_forward(dyn_emb_U, dyn_emb_V, params, *, max_tu=256, max_tv=512):
    """Fused pallas_call implementing DDNE_Dec.forward (eval mode)."""
    num_layers = len(params["U"])
    dec_dims = tuple([params["U"][0]["wt"].shape[0]]
                     + [p["wt"].shape[1] for p in params["U"]])
    num_U, emb = dyn_emb_U.shape
    num_V = dyn_emb_V.shape[0]

    # Row tiles: multiples of 8 sublanes; grid over (U-tile, V-tile) so large graphs
    # stream through VMEM (v7x: 64 MiB). At the toy size this is a (1, 1) grid.
    u_pad = _round_up(num_U, 8)
    tu = u_pad if u_pad <= max_tu else max_tu
    u_pad = _round_up(u_pad, tu)
    v_pad = _round_up(num_V, 8)
    tv = v_pad if v_pad <= max_tv else max_tv
    v_pad = _round_up(v_pad, tv)

    u = dyn_emb_U if u_pad == num_U else \
        jnp.zeros((u_pad, emb), dyn_emb_U.dtype).at[:num_U].set(dyn_emb_U)
    v = dyn_emb_V if v_pad == num_V else \
        jnp.zeros((v_pad, emb), dyn_emb_V.dtype).at[:num_V].set(dyn_emb_V)

    packed = [_pack_layer(params["U"][l], params["V"][l], l == 0)
              for l in range(num_layers)]

    grid = (u_pad // tu, v_pad // tv)
    in_specs = ([pl.BlockSpec((tu, emb), lambda i, j: (i, 0)),
                 pl.BlockSpec((tv, emb), lambda i, j: (j, 0))]
                + [pl.BlockSpec(p.shape, lambda i, j: (0, 0)) for p in packed])
    out_specs = pl.BlockSpec((tu, tv), lambda i, j: (i, j))

    out = pl.pallas_call(
        functools.partial(ddne_dec_kernel, dims=dec_dims),
        out_shape=jax.ShapeDtypeStruct((u_pad, v_pad), jnp.float32),
        grid=grid,
        in_specs=in_specs,
        out_specs=out_specs,
        scratch_shapes=[pltpu.VMEM((tu + tv, emb), jnp.float32)],
        compiler_params=pltpu.CompilerParams(
            dimension_semantics=("parallel", "parallel"),
            vmem_limit_bytes=_vmem_limit_bytes(tu, tv, emb, dec_dims, packed)),
        cost_estimate=_cost_estimate(u_pad, v_pad, tu, tv, dec_dims),
    )(u, v, *packed)

    return out[:num_U, :num_V]


# -----------------------------------------------------------------------------
# Pure-JAX references (correctness checks)
# -----------------------------------------------------------------------------
def ddne_dec_ref(dyn_emb_U, dyn_emb_V, params, *, bf16_matmul=False):
    """bf16_matmul=True mirrors the kernel's bf16-operand / f32-accumulate MXU math;
       bf16_matmul=False is the full-f32 (PyTorch-equivalent) reference."""
    def mm(a, b):
        if bf16_matmul:
            return jnp.dot(a.astype(jnp.bfloat16), b.astype(jnp.bfloat16),
                           preferred_element_type=jnp.float32)
        return jnp.dot(a, b, precision=lax.Precision.HIGHEST,
                       preferred_element_type=jnp.float32)

    num_layers = len(params["U"])
    u, v = dyn_emb_U, dyn_emb_V
    for l in range(num_layers - 1):
        u = jnp.maximum(mm(u, params["U"][l]["wt"]) + params["U"][l]["b"], 0.0)
        v = jnp.maximum(mm(v, params["V"][l]["wt"]) + params["V"][l]["b"], 0.0)
    u = mm(u, params["U"][-1]["wt"]) + params["U"][-1]["b"]
    v = mm(v, params["V"][-1]["wt"]) + params["V"][-1]["b"]
    return jax.nn.sigmoid(mm(u, v.T))


# -----------------------------------------------------------------------------
# Deterministic parameter init (PyTorch nn.Linear-style uniform fan-in scaling)
# -----------------------------------------------------------------------------
def init_linear_params(key, in_f, out_f):
    k1, k2 = jax.random.split(key)
    s = 1.0 / np.sqrt(in_f)
    return dict(
        wt=jax.random.uniform(k1, (in_f, out_f), jnp.float32, -s, s),  # W^T
        b=jax.random.uniform(k2, (1, out_f), jnp.float32, -s, s),
    )


def init_ddne_dec_params(key, dec_dims):
    num_layers = len(dec_dims) - 1
    params = {"U": [], "V": []}
    for l in range(num_layers):
        key, kU, kV = jax.random.split(key, 3)
        params["U"].append(init_linear_params(kU, dec_dims[l], dec_dims[l + 1]))
        params["V"].append(init_linear_params(kV, dec_dims[l], dec_dims[l + 1]))
    return params


# -----------------------------------------------------------------------------
if __name__ == "__main__":
    # Bipartite graph decoder: dyn_emb_* come from the (external) DDNE encoder,
    # whose embedding width is win * 2 * hidden = 4 * 2 * 32 = 256.
    num_U, num_V = 8, 16
    emb_dim = 256
    dec_dims = [emb_dim, 64, 32]       # 2 decoder layers (Linear+ReLU+Dropout, Linear)
    dropout_rate = 0.2                 # eval-mode identity (see TODO in kernel)

    key = jax.random.PRNGKey(0)
    key, pkey, kU, kV = jax.random.split(key, 4)
    params = init_ddne_dec_params(pkey, dec_dims)

    dyn_emb_U = jax.random.uniform(kU, (num_U, emb_dim), jnp.float32)
    dyn_emb_V = jax.random.uniform(kV, (num_V, emb_dim), jnp.float32)

    adj_est = jax.block_until_ready(ddne_dec_forward(dyn_emb_U, dyn_emb_V, params))
    assert adj_est.shape == (num_U, num_V)

    # (1) Tight check against a reference using the same bf16-operand / f32-accumulate math.
    adj_bf16 = ddne_dec_ref(dyn_emb_U, dyn_emb_V, params, bf16_matmul=True)
    np.testing.assert_allclose(np.asarray(adj_est), np.asarray(adj_bf16),
                               atol=1e-5, rtol=1e-5)

    # (2) Loose check against the full-f32 PyTorch-equivalent reference (bf16 MXU tolerance).
    adj_f32 = ddne_dec_ref(dyn_emb_U, dyn_emb_V, params, bf16_matmul=False)
    np.testing.assert_allclose(np.asarray(adj_est), np.asarray(adj_f32),
                               atol=2e-2, rtol=2e-2)

    print("KERNEL_OK")
</pallas_src>

<mosaic_0001>
module attributes {stable_mosaic.version = 11 : i64} {
  func.func @ddne_dec_kernel(%arg0: i32, %arg1: i32, %arg2: memref<8x256xf32, #tpu.memory_space<vmem>>, %arg3: memref<16x256xf32, #tpu.memory_space<vmem>>, %arg4: memref<264x128xf32, #tpu.memory_space<vmem>>, %arg5: memref<136x64xf32, #tpu.memory_space<vmem>>, %arg6: memref<8x16xf32, #tpu.memory_space<vmem>>, %arg7: memref<24x256xf32, #tpu.memory_space<vmem>>) attributes {dimension_semantics = [#tpu.dimension_semantics<parallel>, #tpu.dimension_semantics<parallel>], iteration_bounds = array<i64: 1, 1>, scalar_prefetch = 0 : i64, scratch_operands = 1 : i64, tpu.core_type = #tpu.core_type<tc>, window_params = [{transform_indices = @transform_0, window_bounds = array<i64: 8, 256>}, {transform_indices = @transform_1, window_bounds = array<i64: 16, 256>}, {pipeline_mode = #tpu.pipeline_mode<synchronous>, transform_indices = @transform_2, window_bounds = array<i64: 264, 128>}, {pipeline_mode = #tpu.pipeline_mode<synchronous>, transform_indices = @transform_3, window_bounds = array<i64: 136, 64>}, {transform_indices = @transform_4, window_bounds = array<i64: 8, 16>}]} {
    %c0 = arith.constant 0 : index
    %c0_0 = arith.constant 0 : index
    %0 = vector.load %arg2[%c0, %c0_0] : memref<8x256xf32, #tpu.memory_space<vmem>>, vector<8x256xf32>
    %c0_1 = arith.constant 0 : index
    %c0_2 = arith.constant 0 : index
    %1 = vector.load %arg7[%c0_1, %c0_2] : memref<24x256xf32, #tpu.memory_space<vmem>>, vector<8x256xf32>
    tpu.vector_store %arg7[%c0_1, %c0_2], %0 {strides = array<i32>} : memref<24x256xf32, #tpu.memory_space<vmem>>, vector<8x256xf32>,
    %c0_3 = arith.constant 0 : index
    %c0_4 = arith.constant 0 : index
    %2 = vector.load %arg3[%c0_3, %c0_4] : memref<16x256xf32, #tpu.memory_space<vmem>>, vector<16x256xf32>
    %c8 = arith.constant 8 : index
    %c0_5 = arith.constant 0 : index
    %3 = vector.load %arg7[%c8, %c0_5] : memref<24x256xf32, #tpu.memory_space<vmem>>, vector<16x256xf32>
    tpu.vector_store %arg7[%c8, %c0_5], %2 {strides = array<i32>} : memref<24x256xf32, #tpu.memory_space<vmem>>, vector<16x256xf32>,
    %c0_6 = arith.constant 0 : index
    %c0_7 = arith.constant 0 : index
    %4 = vector.load %arg7[%c0_6, %c0_7] : memref<24x256xf32, #tpu.memory_space<vmem>>, vector<24x256xf32>
    %c0_8 = arith.constant 0 : index
    %c0_9 = arith.constant 0 : index
    %5 = vector.load %arg4[%c0_8, %c0_9] : memref<264x128xf32, #tpu.memory_space<vmem>>, vector<256x128xf32>
    %6 = arith.truncf %5 : vector<256x128xf32> to vector<256x128xbf16>
    %c256 = arith.constant 256 : index
    %c0_10 = arith.constant 0 : index
    %7 = vector.load %arg4[%c256, %c0_10] : memref<264x128xf32, #tpu.memory_space<vmem>>, vector<1x128xf32>
    %8 = arith.truncf %4 : vector<24x256xf32> to vector<24x256xbf16>
    %cst = arith.constant dense<0.000000e+00> : vector<24x128xf32>
    %9 = tpu.matmul %8, %6, %cst {dimension_numbers = #tpu.dot_dimension_numbers<[1], [0], [0], [1], [0, 0, 1, 1], [], []>} : vector<24x256xbf16>, vector<256x128xbf16>, vector<24x128xf32> -> vector<24x128xf32>
    %10 = vector.broadcast %7 : vector<1x128xf32> to vector<24x128xf32>
    %11 = arith.addf %9, %10 : vector<24x128xf32>
    %cst_11 = arith.constant 0.000000e+00 : f32
    %12 = vector.broadcast %cst_11 : f32 to vector<24x128xf32>
    %13 = arith.maximumf %11, %12 : vector<24x128xf32>
    %c0_12 = arith.constant 0 : index
    %c0_13 = arith.constant 0 : index
    %14 = vector.load %arg5[%c0_12, %c0_13] : memref<136x64xf32, #tpu.memory_space<vmem>>, vector<128x64xf32>
    %15 = arith.truncf %14 : vector<128x64xf32> to vector<128x64xbf16>
    %c128 = arith.constant 128 : index
    %c0_14 = arith.constant 0 : index
    %16 = vector.load %arg5[%c128, %c0_14] : memref<136x64xf32, #tpu.memory_space<vmem>>, vector<1x64xf32>
    %17 = arith.truncf %13 : vector<24x128xf32> to vector<24x128xbf16>
    %cst_15 = arith.constant dense<0.000000e+00> : vector<24x64xf32>
    %18 = tpu.matmul %17, %15, %cst_15 {dimension_numbers = #tpu.dot_dimension_numbers<[1], [0], [0], [1], [0, 0, 1, 1], [], []>} : vector<24x128xbf16>, vector<128x64xbf16>, vector<24x64xf32> -> vector<24x64xf32>
    %19 = vector.broadcast %16 : vector<1x64xf32> to vector<24x64xf32>
    %20 = arith.addf %18, %19 : vector<24x64xf32>
    %21 = vector.extract_strided_slice %20 {offsets = [0, 0], sizes = [8, 32], strides = [1, 1]} : vector<24x64xf32> to vector<8x32xf32>
    %22 = arith.truncf %21 : vector<8x32xf32> to vector<8x32xbf16>
    %23 = vector.extract_strided_slice %20 {offsets = [8, 32], sizes = [16, 32], strides = [1, 1]} : vector<24x64xf32> to vector<16x32xf32>
    %24 = arith.truncf %23 : vector<16x32xf32> to vector<16x32xbf16>
    %cst_16 = arith.constant dense<0.000000e+00> : vector<8x16xf32>
    %25 = tpu.matmul %22, %24, %cst_16 {dimension_numbers = #tpu.dot_dimension_numbers<[1], [1], [0], [0], [0, 0, 1, 0], [], []>} : vector<8x32xbf16>, vector<16x32xbf16>, vector<8x16xf32> -> vector<8x16xf32>
    %26 = arith.negf %25 : vector<8x16xf32>
    %27 = math.exp %26 : vector<8x16xf32>
    %cst_17 = arith.constant 1.000000e+00 : f32
    %28 = vector.broadcast %cst_17 : f32 to vector<8x16xf32>
    %29 = arith.addf %28, %27 : vector<8x16xf32>
    %30 = arith.divf %28, %29 : vector<8x16xf32>
    %c0_18 = arith.constant 0 : index
    %c0_19 = arith.constant 0 : index
    %31 = vector.load %arg6[%c0_18, %c0_19] : memref<8x16xf32, #tpu.memory_space<vmem>>, vector<8x16xf32>
    tpu.vector_store %arg6[%c0_18, %c0_19], %30 {strides = array<i32>} : memref<8x16xf32, #tpu.memory_space<vmem>>, vector<8x16xf32>,
    return
  }
  func.func @transform_0(%arg0: i32, %arg1: i32) -> (i32, i32) {
    %c0_i32 = arith.constant 0 : i32
    %c0_i32_0 = arith.constant 0 : i32
    return %arg0, %c0_i32 : i32, i32
  }
  func.func @transform_1(%arg0: i32, %arg1: i32) -> (i32, i32) {
    %c0_i32 = arith.constant 0 : i32
    %c0_i32_0 = arith.constant 0 : i32
    return %arg1, %c0_i32 : i32, i32
  }
  func.func @transform_2(%arg0: i32, %arg1: i32) -> (i32, i32) {
    %c0_i32 = arith.constant 0 : i32
    %c0_i32_0 = arith.constant 0 : i32
    %c0_i32_1 = arith.constant 0 : i32
    return %c0_i32, %c0_i32_0 : i32, i32
  }
  func.func @transform_3(%arg0: i32, %arg1: i32) -> (i32, i32) {
    %c0_i32 = arith.constant 0 : i32
    %c0_i32_0 = arith.constant 0 : i32
    %c0_i32_1 = arith.constant 0 : i32
    return %c0_i32, %c0_i32_0 : i32, i32
  }
  func.func @transform_4(%arg0: i32, %arg1: i32) -> (i32, i32) {
    %c0_i32 = arith.constant 0 : i32
    return %arg0, %arg1 : i32, i32
  }
}

</mosaic_0001>

<llo_original>
// kernel: tpu_custom_call.1
$region0: #{tpu_custom_call.1}
  #allocation0 [shape = 'u32[]', space=smem, size = 0x4, offset = 0x4, fixed_abs, tag = 'smem constant byte address 0x4 - core index']
  #allocation1 [shape = 'u32[144,128]{1,0:T(1,128)}', space=vmem, size = 0x12000, scoped, tag = 'internal scratch']
  #allocation2 [shape = 'f32[24,256]{1,0:T(8,128)}', space=vmem, size = 0x6000, scoped, tag = 'scratch operand']
  %s0 = inlined_call_operand.hbm [shape: f32[8,256], index: 0, kind: input, shape index: {}]
  %s1 = inlined_call_operand.hbm [shape: f32[16,256], index: 1, kind: input, shape index: {}]
  %s2 = inlined_call_operand.vmem [shape: f32[264,128], index: 2, kind: input, shape index: {}]
  %s3 = inlined_call_operand.vmem [shape: f32[136,64], index: 3, kind: input, shape index: {}]
  %s4 = inlined_call_operand.hbm [shape: f32[8,16], index: 4, kind: output, shape index: {}]
  %s5 = sld [smem:[#allocation0]]
  $region34: #{tpu_custom_call.1} parent=0
    _
  %s7 = ssub.s32 1, %s5
  %s8 = scalar_select 0, %s7, %s5
  $region1: #{tpu_custom_call.1} parent=0
    #allocation3 [shape = 'u8[8192]{0}', space=vmem, size = 0x2000, scoped, tag = 'input window, operand 0, single buffered']
    #allocation4 [shape = 's32[1]{0}', space=sflag, size = 0x4, scoped, tag = 'scoped memory for tpu_custom_call.1']
    #allocation5 [shape = 's32[1]{0}', space=sflag, size = 0x4, scoped, tag = 'scoped memory for tpu_custom_call.1']
    #allocation6 [shape = 'u8[16384]{0}', space=vmem, size = 0x4000, scoped, tag = 'input window, operand 1, single buffered']
    #allocation7 [shape = 's32[1]{0}', space=sflag, size = 0x4, scoped, tag = 'scoped memory for tpu_custom_call.1']
    #allocation8 [shape = 'u8[4096]{0}', space=vmem, size = 0x1000, scoped, tag = 'output window, operand 0, single buffered']
    %9 = vsyncpa [#allocation4], 0
    %10 = vsyncpa [#allocation7], 0
    %11 = vsyncpa [#allocation5], 0
    // Predicated region
    $region2: #{tpu_custom_call.1} parent=1 // pred_check
      _
    $region3: #{tpu_custom_call.1} parent=1 // pred_check_branch
      %13 = sbr.rel (0) target = $region5
    $region4: #{tpu_custom_call.1} parent=1 // pred_region
      %s15 = ssub.s32 256, 256
      %16 = vsyncadd [#allocation4], %s15
      %s18 = sshll.u32 [#allocation3], 4
      %s19 = int_to_ptr.vmem [resolvable:$true] %s18
      %21 = dma.hbm_to_vmem [thread:$0]  %s0, 256, %s19, [#allocation4]
    $region5: #{tpu_custom_call.1} parent=1 // pred_fallthru
      _
    // Predicated region
    $region6: #{tpu_custom_call.1} parent=1 // pred_check
      _
    $region7: #{tpu_custom_call.1} parent=1 // pred_check_branch
      %23 = sbr.rel (0) target = $region9
    $region8: #{tpu_custom_call.1} parent=1 // pred_region
      %s25 = ssub.s32 512, 512
      %26 = vsyncadd [#allocation7], %s25
      %s27 = sshll.u32 [#allocation6], 4
      %s28 = int_to_ptr.vmem [resolvable:$true] %s27
      %33 = dma.hbm_to_vmem [thread:$0]  %s1, 512, %s28, [#allocation7], 256, 256, 16
    $region9: #{tpu_custom_call.1} parent=1 // pred_fallthru
      _
    // Predicated region
    $region10: #{tpu_custom_call.1} parent=1 // pred_check
      _
    $region11: #{tpu_custom_call.1} parent=1 // pred_check_branch
      %35 = sbr.rel (0) target = $region13
    $region12: #{tpu_custom_call.1} parent=1 // pred_region
      _
    $region13: #{tpu_custom_call.1} parent=1 // pred_fallthru
      _
    // Predicated region
    $region14: #{tpu_custom_call.1} parent=1 // pred_check
      _
    $region15: #{tpu_custom_call.1} parent=1 // pred_check_branch
      %37 = sbr.rel (0) target = $region17
    $region16: #{tpu_custom_call.1} parent=1 // pred_region
      _
    $region17: #{tpu_custom_call.1} parent=1 // pred_fallthru
      _
    // Predicated region
    $region18: #{tpu_custom_call.1} parent=1 // pred_check
      _
    $region19: #{tpu_custom_call.1} parent=1 // pred_check_branch
      %39 = sbr.rel (0) target = $region21
    $region20: #{tpu_custom_call.1} parent=1 // pred_region
      %40 = dma.done [#allocation4], 256
    $region21: #{tpu_custom_call.1} parent=1 // pred_fallthru
      _
    // Predicated region
    $region22: #{tpu_custom_call.1} parent=1 // pred_check
      _
    $region23: #{tpu_custom_call.1} parent=1 // pred_check_branch
      %42 = sbr.rel (0) target = $region25
    $region24: #{tpu_custom_call.1} parent=1 // pred_region
      %43 = dma.done [#allocation7], 512
    $region25: #{tpu_custom_call.1} parent=1 // pred_fallthru
      _
    %v45 = vld [vmem:[#allocation3] sm:$0xff]
    %v46 = vld [vmem:[#allocation3 + $0x8] sm:$0xff]
    %47 = vst [vmem:[#allocation2] sm:$0xff] %v45
    %48 = vst [vmem:[#allocation2 + $0x8] sm:$0xff] %v46
    %v49 = vld [vmem:[#allocation6] sm:$0xff]
    %v50 = vld [vmem:[#allocation6 + $0x8] sm:$0xff]
    %v51 = vld [vmem:[#allocation6 + $0x10] sm:$0xff]
    %v52 = vld [vmem:[#allocation6 + $0x18] sm:$0xff]
    %53 = vst [vmem:[#allocation2 + $0x10] sm:$0xff] %v49
    %54 = vst [vmem:[#allocation2 + $0x18] sm:$0xff] %v50
    %55 = vst [vmem:[#allocation2 + $0x20] sm:$0xff] %v51
    %56 = vst [vmem:[#allocation2 + $0x28] sm:$0xff] %v52
    %v57 = vld [vmem:[#allocation2] sm:$0xff]
    %v58 = vld [vmem:[#allocation2 + $0x8] sm:$0xff]
    %v59 = vld [vmem:[#allocation2 + $0x10] sm:$0xff]
    %v60 = vld [vmem:[#allocation2 + $0x18] sm:$0xff]
    %v61 = vld [vmem:[#allocation2 + $0x20] sm:$0xff]
    %v62 = vld [vmem:[#allocation2 + $0x28] sm:$0xff]
    %v63 = vld [vmem:[%s2] sm:$0xff]
    %v64 = vld [vmem:[%s2 + $0x8] sm:$0xff]
    %v65 = vld [vmem:[%s2 + $0x10] sm:$0xff]
    %v66 = vld [vmem:[%s2 + $0x18] sm:$0xff]
    %v67 = vld [vmem:[%s2 + $0x20] sm:$0xff]
    %v68 = vld [vmem:[%s2 + $0x28] sm:$0xff]
    %v69 = vld [vmem:[%s2 + $0x30] sm:$0xff]
    %v70 = vld [vmem:[%s2 + $0x38] sm:$0xff]
    %v71 = vld [vmem:[%s2 + $0x40] sm:$0xff]
    %v72 = vld [vmem:[%s2 + $0x48] sm:$0xff]
    %v73 = vld [vmem:[%s2 + $0x50] sm:$0xff]
    %v74 = vld [vmem:[%s2 + $0x58] sm:$0xff]
    %v75 = vld [vmem:[%s2 + $0x60] sm:$0xff]
    %v76 = vld [vmem:[%s2 + $0x68] sm:$0xff]
    %v77 = vld [vmem:[%s2 + $0x70] sm:$0xff]
    %v78 = vld [vmem:[%s2 + $0x78] sm:$0xff]
    %v79 = vld [vmem:[%s2 + $0x80] sm:$0xff]
    %v80 = vld [vmem:[%s2 + $0x88] sm:$0xff]
    %v81 = vld [vmem:[%s2 + $0x90] sm:$0xff]
    %v82 = vld [vmem:[%s2 + $0x98] sm:$0xff]
    %v83 = vld [vmem:[%s2 + $0xa0] sm:$0xff]
    %v84 = vld [vmem:[%s2 + $0xa8] sm:$0xff]
    %v85 = vld [vmem:[%s2 + $0xb0] sm:$0xff]
    %v86 = vld [vmem:[%s2 + $0xb8] sm:$0xff]
    %v87 = vld [vmem:[%s2 + $0xc0] sm:$0xff]
    %v88 = vld [vmem:[%s2 + $0xc8] sm:$0xff]
    %v89 = vld [vmem:[%s2 + $0xd0] sm:$0xff]
    %v90 = vld [vmem:[%s2 + $0xd8] sm:$0xff]
    %v91 = vld [vmem:[%s2 + $0xe0] sm:$0xff]
    %v92 = vld [vmem:[%s2 + $0xe8] sm:$0xff]
    %v93 = vld [vmem:[%s2 + $0xf0] sm:$0xff]
    %v94 = vld [vmem:[%s2 + $0xf8] sm:$0xff]
    %v95 = vpack.c.bf16 %v64, %v63
    %v96 = vpack.c.bf16 %v66, %v65
    %v97 = vpack.c.bf16 %v68, %v67
    %v98 = vpack.c.bf16 %v70, %v69
    %v99 = vpack.c.bf16 %v72, %v71
    %v100 = vpack.c.bf16 %v74, %v73
    %v101 = vpack.c.bf16 %v76, %v75
    %v102 = vpack.c.bf16 %v78, %v77
    %v103 = vpack.c.bf16 %v80, %v79
    %v104 = vpack.c.bf16 %v82, %v81
    %v105 = vpack.c.bf16 %v84, %v83
    %v106 = vpack.c.bf16 %v86, %v85
    %v107 = vpack.c.bf16 %v88, %v87
    %v108 = vpack.c.bf16 %v90, %v89
    %v109 = vpack.c.bf16 %v92, %v91
    %v110 = vpack.c.bf16 %v94, %v93
    %v111 = vld [vmem:[%s2 + $0x100] sm:$0x1]
    %v112 = vpack.c.bf16 %v59, %v57
    %v113 = vpack.c.bf16 %v60, %v58
    %v114 = vpack.c.bf16 %v61, %v61
    %v115 = vpack.c.bf16 %v62, %v62
    %v116 = vlaneseq
    %v117 = vshrl.u32 %v116, 7
    %v118 = vsub.s32 0, %v117
    %v119 = vrot.slane %v111, %v118
    %120 = vmatprep.subr.bf16.mxu0 0
    %121 = vmatpush1.bf16.msra.mxu0 %v102
    %122 = vmatprep.subr.bf16.mxu0 0
    %123 = vmatpush1.bf16.msra.mxu0 %v101
    %124 = vmatprep.subr.bf16.mxu0 0
    %125 = vmatpush1.bf16.msra.mxu0 %v100
    %126 = vmatprep.subr.bf16.mxu0 0
    %127 = vmatpush1.bf16.msra.mxu0 %v99
    %128 = vmatprep.subr.bf16.mxu0 0
    %129 = vmatpush1.bf16.msra.mxu0 %v98
    %130 = vmatprep.subr.bf16.mxu0 0
    %131 = vmatpush1.bf16.msra.mxu0 %v97
    %132 = vmatprep.subr.bf16.mxu0 0
    %133 = vmatpush1.bf16.msra.mxu0 %v96
    %134 = vmatprep.subr.bf16.mxu0 0
    %135 = vmatpush1.bf16.msra.mxu0 %v95
    %136 = vmatprep.subr.bf16.mxu0 0
    %137 = vmatpush2.bf16.msra.mxu0 %v110
    %138 = vmatprep.subr.bf16.mxu0 0
    %139 = vmatpush2.bf16.msra.mxu0 %v109
    %140 = vmatprep.subr.bf16.mxu0 0
    %141 = vmatpush2.bf16.msra.mxu0 %v108
    %142 = vmatprep.subr.bf16.mxu0 0
    %143 = vmatpush2.bf16.msra.mxu0 %v107
    %144 = vmatprep.subr.bf16.mxu0 0
    %145 = vmatpush2.bf16.msra.mxu0 %v106
    %146 = vmatprep.subr.bf16.mxu0 0
    %147 = vmatpush2.bf16.msra.mxu0 %v105
    %148 = vmatprep.subr.bf16.mxu0 0
    %149 = vmatpush2.bf16.msra.mxu0 %v104
    %150 = vmatprep.subr.bf16.mxu0 0
    %151 = vmatpush2.bf16.msra.mxu0 %v103
    %152 = vmatprep.mubr.bf16.mxu0 %v113
    %153 = vmatmul.mubr.bf16.gmra.mxu0 %v112
    %v154 = vpop.f32.mrf.mxu0
    %v155 = vadd.f32 %v119, %v154
    %v156 = vpop.f32.mrf.mxu0
    %v157 = vpop.f32.mrf.mxu0
    %v158 = vadd.f32 %v119, %v157
    %v159 = vpop.f32.mrf.mxu0
    %160 = vmatprep.mubr.bf16.mxu0 %v115
    %161 = vmatmul.mubr.bf16.gmra.mxu0 %v114
    %v162 = vpop.f32.mrf.mxu0
    %v163 = vadd.f32 %v119, %v162
    %v164 = vpop.f32.mrf.mxu0
    %v165 = vpop.f32.mrf.mxu0
    %v166 = vpop.f32.mrf.mxu0
    %167 = vdwg.mxu0
    %v168 = vmax.f32 %v155, 0.0
    %v169 = vmax.f32 %v158, 0.0
    %v170 = vmax.f32 %v163, 0.0
    %v171 = vld [vmem:[%s3] sm:$0xff]
    %v172 = vld [vmem:[%s3 + $0x8] sm:$0xff]
    %v173 = vld [vmem:[%s3 + $0x10] sm:$0xff]
    %v174 = vld [vmem:[%s3 + $0x18] sm:$0xff]
    %v175 = vld [vmem:[%s3 + $0x20] sm:$0xff]
    %v176 = vld [vmem:[%s3 + $0x28] sm:$0xff]
    %v177 = vld [vmem:[%s3 + $0x30] sm:$0xff]
    %v178 = vld [vmem:[%s3 + $0x38] sm:$0xff]
    %v179 = vld [vmem:[%s3 + $0x40] sm:$0xff]
    %v180 = vld [vmem:[%s3 + $0x48] sm:$0xff]
    %v181 = vld [vmem:[%s3 + $0x50] sm:$0xff]
    %v182 = vld [vmem:[%s3 + $0x58] sm:$0xff]
    %v183 = vld [vmem:[%s3 + $0x60] sm:$0xff]
    %v184 = vld [vmem:[%s3 + $0x68] sm:$0xff]
    %v185 = vld [vmem:[%s3 + $0x70] sm:$0xff]
    %v186 = vld [vmem:[%s3 + $0x78] sm:$0xff]
    %v187 = vpack.c.bf16 %v172, %v171
    %v188 = vpack.c.bf16 %v174, %v173
    %v189 = vpack.c.bf16 %v176, %v175
    %v190 = vpack.c.bf16 %v178, %v177
    %v191 = vpack.c.bf16 %v180, %v179
    %v192 = vpack.c.bf16 %v182, %v181
    %v193 = vpack.c.bf16 %v184, %v183
    %v194 = vpack.c.bf16 %v186, %v185
    %v195 = vld [vmem:[%s3 + $0x80] sm:$0x1]
    %v196 = vpack.c.bf16 %v169, %v168
    %v197 = vpack.c.bf16 %v170, %v170
    %v198 = vlaneseq
    %v199 = vshrl.u32 %v198, 7
    %v200 = vsub.s32 0, %v199
    %v201 = vrot.slane %v195, %v200
    %202 = vmatprep.subr.bf16.mxu0 0
    %203 = vmatpush1.bf16.msra.mxu0 %v194
    %204 = vmatprep.subr.bf16.mxu0 0
    %205 = vmatpush1.bf16.msra.mxu0 %v193
    %206 = vmatprep.subr.bf16.mxu0 0
    %207 = vmatpush1.bf16.msra.mxu0 %v192
    %208 = vmatprep.subr.bf16.mxu0 0
    %209 = vmatpush1.bf16.msra.mxu0 %v191
    %210 = vmatprep.subr.bf16.mxu0 0
    %211 = vmatpush1.bf16.msra.mxu0 %v190
    %212 = vmatprep.subr.bf16.mxu0 0
    %213 = vmatpush1.bf16.msra.mxu0 %v189
    %214 = vmatprep.subr.bf16.mxu0 0
    %215 = vmatpush1.bf16.msra.mxu0 %v188
    %216 = vmatprep.subr.bf16.mxu0 0
    %217 = vmatpush1.bf16.msra.mxu0 %v187
    %218 = vmatprep.subr.bf16.mxu0 0
    %219 = vmatpush2.bf16.msra.mxu0 0
    %220 = vmatprep.subr.bf16.mxu0 0
    %221 = vmatpush2.bf16.msra.mxu0 0
    %222 = vmatprep.subr.bf16.mxu0 0
    %223 = vmatpush2.bf16.msra.mxu0 0
    %224 = vmatprep.subr.bf16.mxu0 0
    %225 = vmatpush2.bf16.msra.mxu0 0
    %226 = vmatprep.subr.bf16.mxu0 0
    %227 = vmatpush2.bf16.msra.mxu0 0
    %228 = vmatprep.subr.bf16.mxu0 0
    %229 = vmatpush2.bf16.msra.mxu0 0
    %230 = vmatprep.subr.bf16.mxu0 0
    %231 = vmatpush2.bf16.msra.mxu0 0
    %232 = vmatprep.subr.bf16.mxu0 0
    %233 = vmatpush2.bf16.msra.mxu0 0
    %234 = vmatprep.mubr.bf16.mxu0 0
    %235 = vmatmul.mubr.bf16.gmra.mxu0 %v196
    %v236 = vpop.f32.mrf.mxu0
    %v237 = vadd.f32 %v201, %v236
    %v238 = vpop.f32.mrf.mxu0
    %v239 = vpop.f32.mrf.mxu0
    %v240 = vadd.f32 %v201, %v239
    %v241 = vpop.f32.mrf.mxu0
    %242 = vmatprep.mubr.bf16.mxu0 0
    %243 = vmatmul.mubr.bf16.gmra.mxu0 %v197
    %v244 = vpop.f32.mrf.mxu0
    %v245 = vadd.f32 %v201, %v244
    %v246 = vpop.f32.mrf.mxu0
    %v247 = vpop.f32.mrf.mxu0
    %v248 = vpop.f32.mrf.mxu0
    %249 = vdwg.mxu0
    %v250 = vpack.c.bf16 %v237, %v237
    %v251 = vpack.c.bf16 %v245, %v240
    %253 = vrot.lane.b32.xlu0 %v251, 96
    %v254 = vpop.permute.xlu0 %253
    %vm255 = vcmask 261120
    %v257 = vsel %vm255, %v250, 0
    %v260 = vsel %vm255, %v254, 0
    %262 = vmatprep.subr.bf16.mxu0 0
    %263 = vmatpush1.bf16.xpose.msra.mxu0 0
    %264 = vmatprep.subr.bf16.mxu0 0
    %265 = vmatpush1.bf16.xpose.msra.mxu0 0
    %266 = vmatprep.subr.bf16.mxu0 0
    %267 = vmatpush1.bf16.xpose.msra.mxu0 0
    %268 = vmatprep.subr.bf16.mxu0 0
    %269 = vmatpush1.bf16.xpose.msra.mxu0 0
    %270 = vmatprep.subr.bf16.mxu0 0
    %271 = vmatpush1.bf16.xpose.msra.mxu0 0
    %272 = vmatprep.subr.bf16.mxu0 0
    %273 = vmatpush1.bf16.xpose.msra.mxu0 0
    %274 = vmatprep.subr.bf16.mxu0 0
    %275 = vmatpush1.bf16.xpose.msra.mxu0 0
    %276 = vmatprep.subr.bf16.mxu0 0
    %277 = vmatpush1.bf16.xpose.msra.mxu0 %v260
    %278 = vmatprep.subr.bf16.mxu0 0
    %279 = vmatpush2.bf16.xpose.msra.mxu0 0
    %280 = vmatprep.subr.bf16.mxu0 0
    %281 = vmatpush2.bf16.xpose.msra.mxu0 0
    %282 = vmatprep.subr.bf16.mxu0 0
    %283 = vmatpush2.bf16.xpose.msra.mxu0 0
    %284 = vmatprep.subr.bf16.mxu0 0
    %285 = vmatpush2.bf16.xpose.msra.mxu0 0
    %286 = vmatprep.subr.bf16.mxu0 0
    %287 = vmatpush2.bf16.xpose.msra.mxu0 0
    %288 = vmatprep.subr.bf16.mxu0 0
    %289 = vmatpush2.bf16.xpose.msra.mxu0 0
    %290 = vmatprep.subr.bf16.mxu0 0
    %291 = vmatpush2.bf16.xpose.msra.mxu0 0
    %292 = vmatprep.subr.bf16.mxu0 0
    %293 = vmatpush2.bf16.xpose.msra.mxu0 0
    %294 = vmatprep.mubr.bf16.mxu0 0
    %295 = vmatmul.mubr.bf16.gmra.mxu0 %v257
    %v296 = vpop.f32.mrf.mxu0
    %v297 = vadd.f32 0.0, %v296
    %v298 = vpop.f32.mrf.mxu0
    %v299 = vpop.f32.mrf.mxu0
    %v300 = vpop.f32.mrf.mxu0
    %301 = vdwg.mxu0
    %v302 = vxor.u32 %v297, 2147483648
    %v303 = vmul.f32 %v302, 1.442695
    %v304 = vpow.pop %v303
    %v305 = vadd.f32 %v304, 1.0
    %v306 = vrcp.pop %v305
    %v307 = vmul.f32 1.0, %v306
    %vm308 = vcmask 130048
    %309 = vst.msk [vmem:[#allocation8] sm:$0xff] %vm308, %v307
    // Predicated region
    $region26: #{tpu_custom_call.1} parent=1 // pred_check
      _
    $region27: #{tpu_custom_call.1} parent=1 // pred_check_branch
      %311 = sbr.rel (0) target = $region29
    $region28: #{tpu_custom_call.1} parent=1 // pred_region
      %s313 = ssub.s32 128, 128
      %314 = vsyncadd [#allocation5], %s313
      %s316 = sshll.u32 [#allocation8], 4
      %s317 = int_to_ptr.vmem [resolvable:$true] %s316
      %319 = dma.vmem_to_hbm [thread:$0]  %s317, 128, %s4, [#allocation5]
    $region29: #{tpu_custom_call.1} parent=1 // pred_fallthru
      _
    // Predicated region
    $region30: #{tpu_custom_call.1} parent=1 // pred_check
      _
    $region31: #{tpu_custom_call.1} parent=1 // pred_check_branch
      %321 = sbr.rel (0) target = $region33
    $region32: #{tpu_custom_call.1} parent=1 // pred_region
      %322 = dma.done [#allocation5], 128
    $region33: #{tpu_custom_call.1} parent=1 // pred_fallthru
      _
    %323 = vsyncpa [#allocation4], 1
    %324 = vsyncpa [#allocation7], 1
    %325 = vsyncpa [#allocation5], 1

</llo_original>
